<compile_context>
chip_gen: v7x
topology: tpu7x:2x2x1
jax: 0.10.0
libtpu: 0.0.40
codegen_flags: <defaults>
</compile_context>

<pallas_src>
import functools

import jax
import jax.numpy as jnp
from jax import lax
from jax.experimental import pallas as pl
from jax.experimental.pallas import tpu as pltpu

EPS = 1e-6  # matches torch.nn.functional.pairwise_distance default eps


def _sublane(dtype):
    """Minimum row-tile granularity for a dtype (8 f32, 16 bf16, 32 int8/fp8)."""
    return max(8, 32 // jnp.dtype(dtype).itemsize)


def _vmem_budget_bytes():
    """Budget for the double-buffered input tiles, per chip generation."""
    try:
        kind = jax.devices()[0].device_kind.lower()
    except Exception:
        kind = ""
    if "v6" in kind or "v7" in kind:
        return 24 * 1024 * 1024   # 32 MiB scoped default -> big per-step DMA
    if "v5e" in kind or "v5 lite" in kind or "v5lite" in kind:
        return 10 * 1024 * 1024   # v5e scoped default is only 16 MiB
    return 12 * 1024 * 1024       # unknown / older chips: stay conservative


def _pick_tile_n(n, d, dtype):
    """Largest row tile fitting the VMEM budget (lane-padded accounting)."""
    itemsize = jnp.dtype(dtype).itemsize
    sub = _sublane(dtype)
    d_pad = pl.cdiv(d, 128) * 128              # VMEM pads the lane dim to 128
    bytes_per_row = 3 * 2 * d_pad * itemsize   # 3 inputs x 2 pipeline buffers
    max_rows = max(sub, _vmem_budget_bytes() // bytes_per_row)
    tile = max(sub, (int(max_rows) // sub) * sub)
    if tile >= n:
        # Whole batch fits in one tile.  Split into two tiles when the batch is
        # big enough so both v7x TensorCores get work (harmless on 1-TC chips).
        half = pl.cdiv(pl.cdiv(n, 2), sub) * sub
        if n >= 2 * sub and half < n:
            return int(half)
        return int(n)   # single full-array block (always a legal block shape)
    return int(tile)


def triplet_hinge_kernel(neg_ref, neg2_ref, anchor_ref, out_ref, *,
                         margin, n, tile_n):
    # anchor = embed_neg, positive = embed_neg2, negative = embed_anchor
    neg = neg_ref[...].astype(jnp.float32)
    neg2 = neg2_ref[...].astype(jnp.float32)
    anchor = anchor_ref[...].astype(jnp.float32)

    def pdist(a, b):
        # torch pairwise_distance(p=2): ||a - b + eps||_2 along the last dim
        diff = a - b + EPS
        return jnp.sqrt(jnp.sum(diff * diff, axis=-1, keepdims=True))  # (rows, 1)

    hinge = jnp.maximum(pdist(neg, neg2) - pdist(neg, anchor) + margin, 0.0)

    # Mask rows past the true batch size (the partial last tile holds garbage
    # rows; jnp.where also neutralizes any NaN/Inf they may produce).
    row = lax.broadcasted_iota(jnp.int32, hinge.shape, 0) + pl.program_id(0) * tile_n
    hinge = jnp.where(row < n, hinge, 0.0)

    # One partial sum per tile, written into a full lane-dense (1, 8, 128) block.
    out_ref[...] = jnp.broadcast_to(jnp.sum(hinge), out_ref.shape)


def my_loss_ablation2(embed_anchor, embed_pos, embed_neg, embed_neg2, embed_pos2,
                      margin1, margin2, *, tile_n=None):
    """Forward pass of MyLoss_abaltion2. Returns a scalar (0-d) loss."""
    # loss_tml2 is dead code in the reference module's forward — never streamed.
    del embed_pos, embed_pos2, margin2

    n, d = embed_neg.shape
    dtype = embed_neg.dtype
    itemsize = jnp.dtype(dtype).itemsize
    if tile_n is None:
        tile_n = _pick_tile_n(n, d, dtype)
    num_tiles = pl.cdiv(n, tile_n)

    kernel = functools.partial(triplet_hinge_kernel, margin=float(margin1),
                               n=n, tile_n=tile_n)

    partials = pl.pallas_call(
        kernel,
        out_shape=jax.ShapeDtypeStruct((num_tiles, 8, 128), jnp.float32),
        grid_spec=pltpu.PrefetchScalarGridSpec(
            num_scalar_prefetch=0,
            grid=(num_tiles,),
            in_specs=[
                pl.BlockSpec((tile_n, d), lambda i: (i, 0)),  # embed_neg   (anchor)
                pl.BlockSpec((tile_n, d), lambda i: (i, 0)),  # embed_neg2  (positive)
                pl.BlockSpec((tile_n, d), lambda i: (i, 0)),  # embed_anchor(negative)
            ],
            out_specs=pl.BlockSpec((1, 8, 128), lambda i: (i, 0, 0)),
        ),
        compiler_params=pltpu.CompilerParams(
            dimension_semantics=("parallel",),
        ),
        cost_estimate=pl.CostEstimate(
            flops=8 * n * d,
            transcendentals=2 * n,
            bytes_accessed=3 * n * d * itemsize + num_tiles * 8 * 128 * 4,
        ),
    )(embed_neg, embed_neg2, embed_anchor)

    # Tiny epilogue: sum num_tiles partial sums and divide once.
    return jnp.sum(partials[:, 0, 0]) / n


def _ref_loss(embed_anchor, embed_pos, embed_neg, embed_neg2, embed_pos2,
              margin1, margin2):
    def pdist(a, b):
        diff = a - b + EPS
        return jnp.sqrt(jnp.sum(diff * diff, axis=-1))
    l1 = jnp.mean(jnp.maximum(
        pdist(embed_neg, embed_neg2) - pdist(embed_neg, embed_anchor) + margin1, 0.0))
    return l1  # loss_tml2 discarded by the module's forward


if __name__ == "__main__":
    key = jax.random.PRNGKey(0)
    N, D = 20, 32           # small; N not a multiple of the auto/forced tiles
    margin1, margin2 = 1.0, 2.0

    k_a, k_p, k_n, k_n2, k_p2 = jax.random.split(key, 5)
    embed_anchor = jax.random.normal(k_a, (N, D), dtype=jnp.float32)
    embed_pos    = jax.random.normal(k_p, (N, D), dtype=jnp.float32)
    embed_neg    = jax.random.normal(k_n, (N, D), dtype=jnp.float32)
    embed_neg2   = jax.random.normal(k_n2, (N, D), dtype=jnp.float32)
    embed_pos2   = jax.random.normal(k_p2, (N, D), dtype=jnp.float32)

    ref = _ref_loss(embed_anchor, embed_pos, embed_neg, embed_neg2, embed_pos2,
                    margin1, margin2)

    # 1) default tiling (auto-split into 2 tiles with a partial last tile)
    out_auto = my_loss_ablation2(embed_anchor, embed_pos, embed_neg, embed_neg2,
                                 embed_pos2, margin1, margin2)
    out_auto = jax.block_until_ready(out_auto)
    assert jnp.allclose(out_auto, ref, rtol=1e-5, atol=1e-5), (out_auto, ref)

    # 2) forced multi-tile path (3 tiles, exercises the masked partial tile)
    out_tiled = my_loss_ablation2(embed_anchor, embed_pos, embed_neg, embed_neg2,
                                  embed_pos2, margin1, margin2, tile_n=8)
    out_tiled = jax.block_until_ready(out_tiled)
    assert jnp.allclose(out_tiled, ref, rtol=1e-5, atol=1e-5), (out_tiled, ref)

    # 3) bf16-streamed inputs (half the HBM traffic), f32 accumulation in-kernel.
    bf16_inputs = [x.astype(jnp.bfloat16) for x in
                   (embed_anchor, embed_pos, embed_neg, embed_neg2, embed_pos2)]
    ref_bf16 = _ref_loss(*(x.astype(jnp.float32) for x in bf16_inputs),
                         margin1, margin2)
    out_bf16 = my_loss_ablation2(*bf16_inputs, margin1, margin2)
    out_bf16 = jax.block_until_ready(out_bf16)
    assert jnp.allclose(out_bf16, ref_bf16, rtol=1e-5, atol=1e-5), (out_bf16, ref_bf16)

    print("KERNEL_OK")
</pallas_src>

<mosaic_0001>
module attributes {stable_mosaic.version = 11 : i64} {
  func.func @triplet_hinge_kernel(%arg0: i32, %arg1: memref<16x32xf32, #tpu.memory_space<vmem>>, %arg2: memref<16x32xf32, #tpu.memory_space<vmem>>, %arg3: memref<16x32xf32, #tpu.memory_space<vmem>>, %arg4: memref<1x8x128xf32, #tpu.memory_space<vmem>>) attributes {dimension_semantics = [#tpu.dimension_semantics<parallel>], iteration_bounds = array<i64: 2>, scalar_prefetch = 0 : i64, scratch_operands = 0 : i64, tpu.core_type = #tpu.core_type<tc>, window_params = [{transform_indices = @transform_0, window_bounds = array<i64: 16, 32>}, {transform_indices = @transform_1, window_bounds = array<i64: 16, 32>}, {transform_indices = @transform_2, window_bounds = array<i64: 16, 32>}, {transform_indices = @transform_3, window_bounds = array<i64: 1, 8, 128>}]} {
    %c0 = arith.constant 0 : index
    %c0_0 = arith.constant 0 : index
    %0 = vector.load %arg1[%c0, %c0_0] : memref<16x32xf32, #tpu.memory_space<vmem>>, vector<16x32xf32>
    %c0_1 = arith.constant 0 : index
    %c0_2 = arith.constant 0 : index
    %1 = vector.load %arg2[%c0_1, %c0_2] : memref<16x32xf32, #tpu.memory_space<vmem>>, vector<16x32xf32>
    %c0_3 = arith.constant 0 : index
    %c0_4 = arith.constant 0 : index
    %2 = vector.load %arg3[%c0_3, %c0_4] : memref<16x32xf32, #tpu.memory_space<vmem>>, vector<16x32xf32>
    %3 = arith.subf %0, %1 : vector<16x32xf32>
    %cst = arith.constant 9.99999997E-7 : f32
    %4 = vector.broadcast %cst : f32 to vector<16x32xf32>
    %5 = arith.addf %3, %4 : vector<16x32xf32>
    %6 = arith.mulf %5, %5 : vector<16x32xf32>
    %cst_5 = arith.constant dense<0.000000e+00> : vector<16xf32>
    %7 = vector.multi_reduction <add>, %6, %cst_5 [1] : vector<16x32xf32> to vector<16xf32>
    %8 = vector.shape_cast %7 : vector<16xf32> to vector<16x1xf32>
    %9 = math.sqrt %8 : vector<16x1xf32>
    %10 = arith.subf %0, %2 : vector<16x32xf32>
    %cst_6 = arith.constant 9.99999997E-7 : f32
    %11 = vector.broadcast %cst_6 : f32 to vector<16x32xf32>
    %12 = arith.addf %10, %11 : vector<16x32xf32>
    %13 = arith.mulf %12, %12 : vector<16x32xf32>
    %cst_7 = arith.constant dense<0.000000e+00> : vector<16xf32>
    %14 = vector.multi_reduction <add>, %13, %cst_7 [1] : vector<16x32xf32> to vector<16xf32>
    %15 = vector.shape_cast %14 : vector<16xf32> to vector<16x1xf32>
    %16 = math.sqrt %15 : vector<16x1xf32>
    %17 = arith.subf %9, %16 : vector<16x1xf32>
    %cst_8 = arith.constant 1.000000e+00 : f32
    %18 = vector.broadcast %cst_8 : f32 to vector<16x1xf32>
    %19 = arith.addf %17, %18 : vector<16x1xf32>
    %cst_9 = arith.constant 0.000000e+00 : f32
    %20 = vector.broadcast %cst_9 : f32 to vector<16x1xf32>
    %21 = arith.maximumf %19, %20 : vector<16x1xf32>
    %22 = tpu.iota {dimensions = array<i32: 0>} : vector<16x1xi32>
    %c16_i32 = arith.constant 16 : i32
    %23 = arith.muli %arg0, %c16_i32 : i32
    %24 = vector.broadcast %23 : i32 to vector<16x1xi32>
    %25 = arith.addi %22, %24 : vector<16x1xi32>
    %c20_i32 = arith.constant 20 : i32
    %26 = vector.broadcast %c20_i32 : i32 to vector<16x1xi32>
    %27 = arith.cmpi slt, %25, %26 : vector<16x1xi32>
    %cst_10 = arith.constant 0.000000e+00 : f32
    %28 = vector.broadcast %cst_10 : f32 to vector<16x1xf32>
    %29 = arith.select %27, %21, %28 : vector<16x1xi1>, vector<16x1xf32>
    %30 = vector.shape_cast %29 : vector<16x1xf32> to vector<1x16x1xf32>
    %cst_11 = arith.constant dense<0.000000e+00> : vector<1xf32>
    %31 = vector.multi_reduction <add>, %30, %cst_11 [1, 2] : vector<1x16x1xf32> to vector<1xf32>
    %32 = vector.shape_cast %31 : vector<1xf32> to vector<1x1x1xf32>
    %33 = vector.extract %32[0, 0, 0] : f32 from vector<1x1x1xf32>
    %34 = vector.broadcast %33 : f32 to vector<1x8x128xf32>
    %c0_12 = arith.constant 0 : index
    %c0_13 = arith.constant 0 : index
    %c0_14 = arith.constant 0 : index
    %35 = vector.load %arg4[%c0_12, %c0_13, %c0_14] : memref<1x8x128xf32, #tpu.memory_space<vmem>>, vector<1x8x128xf32>
    tpu.vector_store %arg4[%c0_12, %c0_13, %c0_14], %34 {strides = array<i32>} : memref<1x8x128xf32, #tpu.memory_space<vmem>>, vector<1x8x128xf32>,
    return
  }
  func.func @transform_0(%arg0: i32) -> (i32, i32) {
    %c0_i32 = arith.constant 0 : i32
    %c0_i32_0 = arith.constant 0 : i32
    return %arg0, %c0_i32 : i32, i32
  }
  func.func @transform_1(%arg0: i32) -> (i32, i32) {
    %c0_i32 = arith.constant 0 : i32
    %c0_i32_0 = arith.constant 0 : i32
    return %arg0, %c0_i32 : i32, i32
  }
  func.func @transform_2(%arg0: i32) -> (i32, i32) {
    %c0_i32 = arith.constant 0 : i32
    %c0_i32_0 = arith.constant 0 : i32
    return %arg0, %c0_i32 : i32, i32
  }
  func.func @transform_3(%arg0: i32) -> (i32, i32, i32) {
    %c0_i32 = arith.constant 0 : i32
    %c0_i32_0 = arith.constant 0 : i32
    %c0_i32_1 = arith.constant 0 : i32
    return %arg0, %c0_i32, %c0_i32_0 : i32, i32, i32
  }
}

</mosaic_0001>

<llo_original>
// kernel: tpu_custom_call.1
$region0: #{tpu_custom_call.1}
  #allocation0 [shape = 'u32[]', space=smem, size = 0x4, offset = 0x4, fixed_abs, tag = 'smem constant byte address 0x4 - core index']
  #allocation1 [shape = 'u32[144,128]{1,0:T(1,128)}', space=vmem, size = 0x12000, scoped, tag = 'internal scratch']
  %s0 = inlined_call_operand.hbm [shape: f32[20,32], index: 0, kind: input, shape index: {}]
  %s1 = inlined_call_operand.hbm [shape: f32[20,32], index: 1, kind: input, shape index: {}]
  %s2 = inlined_call_operand.hbm [shape: f32[20,32], index: 2, kind: input, shape index: {}]
  %s3 = inlined_call_operand.hbm [shape: f32[2,8,128], index: 3, kind: output, shape index: {}]
  %s4 = sld [smem:[#allocation0]]
  $region57: #{tpu_custom_call.1} parent=0
    _
  %s6 = ssub.s32 1, %s4
  %s7 = scalar_select 0, %s6, %s4
  $region1: #{tpu_custom_call.1} parent=0
    #allocation2 [shape = 'u8[16384]{0}', space=vmem, size = 0x4000, scoped, tag = 'input window, operand 0']
    #allocation3 [shape = 's32[2]{0}', space=sflag, size = 0x8, scoped, tag = 'scoped memory for tpu_custom_call.1']
    #allocation4 [shape = 's32[2]{0}', space=sflag, size = 0x8, scoped, tag = 'scoped memory for tpu_custom_call.1']
    #allocation5 [shape = 'u8[16384]{0}', space=vmem, size = 0x4000, scoped, tag = 'input window, operand 1']
    #allocation6 [shape = 's32[2]{0}', space=sflag, size = 0x8, scoped, tag = 'scoped memory for tpu_custom_call.1']
    #allocation7 [shape = 'u8[16384]{0}', space=vmem, size = 0x4000, scoped, tag = 'input window, operand 2']
    #allocation8 [shape = 'u8[8192]{0}', space=vmem, size = 0x2000, scoped, tag = 'output window, operand 0']
    %8 = vsyncpa [#allocation3], 0
    %s9 = scalar_lea.sflag [#allocation3], 1
    %10 = vsyncpa %s9, 0
    %11 = vsyncpa [#allocation6], 0
    %s12 = scalar_lea.sflag [#allocation6], 1
    %13 = vsyncpa %s12, 0
    %14 = vsyncpa [#allocation4], 0
    %s15 = scalar_lea.sflag [#allocation4], 1
    %16 = vsyncpa %s15, 0
    loop: start=0, step=1, limit=4
    $region2: #{tpu_custom_call.1} parent=1 // loop_pre_header
      _
    $region3: #{tpu_custom_call.1} parent=1 // loop_header
      %s18 = sphi 0, %s22
      %p19 = scmp.ge.s32.totalorder %s18, 4
      %s28 = sphi 0, %s30
      %s31 = sphi 0, %s28
      %s32 = sphi 0, %s31
      %s48 = sphi 0, %s32
      %s54 = sphi 0, %s56
      %s57 = sphi 0, %s54
      %s58 = sphi 0, %s57
      %s74 = sphi 0, %s58
      %s80 = sphi 0, %s82
      %s83 = sphi 0, %s80
      %s84 = sphi 0, %s83
      %s100 = sphi 0, %s84
      %s106 = sphi 0, %s108
      %s109 = sphi 0, %s106
      %s110 = sphi 0, %s109
      %s126 = sphi 0, %s110
    $region4: #{tpu_custom_call.1} parent=1 // loop_header_branch
      %21 = sbr.rel (%p19) target = $region8
    $region5: #{tpu_custom_call.1} parent=1 // loop_body
      %s23 = ssub.s32 %s18, 1
      %s24 = ssub.s32 %s18, 2
      %s25 = sadd.s32 %s18, 1
      %s26 = ssub.s32 %s18, %s25
      %p27 = scmp.eq.s32.totalorder %s26, 0
      %s29 = sadd.s32 %s28, 1
      %s30 = scalar_select %p27, %s28, %s29
      %p33 = pneg %p27
      %p34 = scmp.eq.s32.totalorder %s18, 1
      %p35 = por %p33, %p34
      %p36 = scmp.ne.s32.totalorder %s28, %s31
      %p37 = scmp.eq.s32.totalorder %s18, 0
      %p38 = por %p36, %p37
      %p39 = scmp.ne.s32.totalorder %s28, %s31
      %p40 = scmp.eq.s32.totalorder %s23, 1
      %p41 = por %p39, %p40
      %p42 = scmp.ne.s32.totalorder %s31, %s32
      %p43 = scmp.eq.s32.totalorder %s23, 0
      %p44 = por %p42, %p43
      %p45 = scmp.ne.s32.totalorder %s31, %s32
      %p46 = scmp.eq.s32.totalorder %s24, 1
      %p47 = por %p45, %p46
      %p49 = scmp.ne.s32.totalorder %s32, %s48
      %p50 = scmp.eq.s32.totalorder %s24, 0
      %p51 = por %p49, %p50
      %s52 = ssub.s32 %s18, %s25
      %p53 = scmp.eq.s32.totalorder %s52, 0
      %s55 = sadd.s32 %s54, 1
      %s56 = scalar_select %p53, %s54, %s55
      %p59 = pneg %p53
      %p60 = scmp.eq.s32.totalorder %s18, 1
      %p61 = por %p59, %p60
      %p62 = scmp.ne.s32.totalorder %s54, %s57
      %p63 = scmp.eq.s32.totalorder %s18, 0
      %p64 = por %p62, %p63
      %p65 = scmp.ne.s32.totalorder %s54, %s57
      %p66 = scmp.eq.s32.totalorder %s23, 1
      %p67 = por %p65, %p66
      %p68 = scmp.ne.s32.totalorder %s57, %s58
      %p69 = scmp.eq.s32.totalorder %s23, 0
      %p70 = por %p68, %p69
      %p71 = scmp.ne.s32.totalorder %s57, %s58
      %p72 = scmp.eq.s32.totalorder %s24, 1
      %p73 = por %p71, %p72
      %p75 = scmp.ne.s32.totalorder %s58, %s74
      %p76 = scmp.eq.s32.totalorder %s24, 0
      %p77 = por %p75, %p76
      %s78 = ssub.s32 %s18, %s25
      %p79 = scmp.eq.s32.totalorder %s78, 0
      %s81 = sadd.s32 %s80, 1
      %s82 = scalar_select %p79, %s80, %s81
      %p85 = pneg %p79
      %p86 = scmp.eq.s32.totalorder %s18, 1
      %p87 = por %p85, %p86
      %p88 = scmp.ne.s32.totalorder %s80, %s83
      %p89 = scmp.eq.s32.totalorder %s18, 0
      %p90 = por %p88, %p89
      %p91 = scmp.ne.s32.totalorder %s80, %s83
      %p92 = scmp.eq.s32.totalorder %s23, 1
      %p93 = por %p91, %p92
      %p94 = scmp.ne.s32.totalorder %s83, %s84
      %p95 = scmp.eq.s32.totalorder %s23, 0
      %p96 = por %p94, %p95
      %p97 = scmp.ne.s32.totalorder %s83, %s84
      %p98 = scmp.eq.s32.totalorder %s24, 1
      %p99 = por %p97, %p98
      %p101 = scmp.ne.s32.totalorder %s84, %s100
      %p102 = scmp.eq.s32.totalorder %s24, 0
      %p103 = por %p101, %p102
      %s104 = ssub.s32 %s18, %s25
      %p105 = scmp.eq.s32.totalorder %s104, 0
      %s107 = sadd.s32 %s106, 1
      %s108 = scalar_select %p105, %s106, %s107
      %p111 = pneg %p105
      %p112 = scmp.eq.s32.totalorder %s18, 1
      %p113 = por %p111, %p112
      %p114 = scmp.ne.s32.totalorder %s106, %s109
      %p115 = scmp.eq.s32.totalorder %s18, 0
      %p116 = por %p114, %p115
      %p117 = scmp.ne.s32.totalorder %s106, %s109
      %p118 = scmp.eq.s32.totalorder %s23, 1
      %p119 = por %p117, %p118
      %p120 = scmp.ne.s32.totalorder %s109, %s110
      %p121 = scmp.eq.s32.totalorder %s23, 0
      %p122 = por %p120, %p121
      %p123 = scmp.ne.s32.totalorder %s109, %s110
      %p124 = scmp.eq.s32.totalorder %s24, 1
      %p125 = por %p123, %p124
      %p127 = scmp.ne.s32.totalorder %s110, %s126
      %p128 = scmp.eq.s32.totalorder %s24, 0
      %p129 = por %p127, %p128
      %p130 = scmp.le.s32.totalorder 1, %s18
      %p131 = scmp.lt.s32.totalorder %s18, 3
      %p132 = pnand %p130, %p131
      %p133 = pneg %p132
      // Predicated region
      $region9: #{tpu_custom_call.1} parent=5 // pred_check
        _
      $region10: #{tpu_custom_call.1} parent=5 // pred_check_branch
        %135 = sbr.rel (%p132) target = $region12
      $region11: #{tpu_custom_call.1} parent=5 // pred_region
        %s136 = ssub.s32 %s18, 1
      $region12: #{tpu_custom_call.1} parent=5 // pred_fallthru
        _
      %p137 = scmp.lt.s32.totalorder %s18, 2
      // Predicated region
      $region13: #{tpu_custom_call.1} parent=5 // pred_check
        %p138 = pneg %p137
      $region14: #{tpu_custom_call.1} parent=5 // pred_check_branch
        %140 = sbr.rel (%p138) target = $region16
      $region15: #{tpu_custom_call.1} parent=5 // pred_region
        // Predicated region
        $region17: #{tpu_custom_call.1} parent=15 // pred_check
          %p141 = pneg %p38
        $region18: #{tpu_custom_call.1} parent=15 // pred_check_branch
          %143 = sbr.rel (%p141) target = $region20
        $region19: #{tpu_custom_call.1} parent=15 // pred_region
          %s144 = sand.u32 %s28, 1
          %s145 = scalar_lea.sflag [#allocation3], %s144
          %s146 = sand.u32 %s28, 1
          %s147 = smul.addr %s146, 16
          %s148 = scalar_lea.vmem [#allocation2], %s147
          %s149 = smul.u32 2, %s18
          %s150 = ssub.s32 3, %s149
          %p151 = scmp.lt.s32.totalorder %s150, 2
          %s152 = scalar_select %p151, %s150, 2
          %s153 = smul.u32 128, %s152
          %s155 = ssub.s32 256, %s153
          %156 = vsyncadd %s145, %s155
          %p157 = scmp.ne.s32.totalorder 0, %s153
          %s158 = smul.addr %s149, 128
          %s159 = scalar_lea.hbm %s0, %s158
          %s160 = smul.u32 8, %s152
          %s161 = sshll.u32 %s148, 4
          %s162 = int_to_ptr.vmem [resolvable:$true] %s161
          %s163 = sshll.u32 %s160, 4
          %167 = dma.hbm_to_vmem [thread:$0]  (%p157), %s159, %s163, %s162, %s145, 128, 128, 8
        $region20: #{tpu_custom_call.1} parent=15 // pred_fallthru
          _
        // Predicated region
        $region21: #{tpu_custom_call.1} parent=15 // pred_check
          %p168 = pneg %p64
        $region22: #{tpu_custom_call.1} parent=15 // pred_check_branch
          %170 = sbr.rel (%p168) target = $region24
        $region23: #{tpu_custom_call.1} parent=15 // pred_region
          %s171 = sand.u32 %s18, 1
          %s172 = scalar_lea.sflag [#allocation6], %s171
          %s173 = sand.u32 %s54, 1
          %s174 = smul.addr %s173, 16
          %s175 = scalar_lea.vmem [#allocation5], %s174
          %s176 = smul.u32 2, %s18
          %s177 = ssub.s32 3, %s176
          %p178 = scmp.lt.s32.totalorder %s177, 2
          %s179 = scalar_select %p178, %s177, 2
          %s180 = smul.u32 128, %s179
          %s182 = ssub.s32 256, %s180
          %183 = vsyncadd %s172, %s182
          %p184 = scmp.ne.s32.totalorder 0, %s180
          %s185 = smul.addr %s176, 128
          %s186 = scalar_lea.hbm %s1, %s185
          %s187 = smul.u32 8, %s179
          %s188 = sshll.u32 %s175, 4
          %s189 = int_to_ptr.vmem [resolvable:$true] %s188
          %s190 = sshll.u32 %s187, 4
          %194 = dma.hbm_to_vmem [thread:$0]  (%p184), %s186, %s190, %s189, %s172, 128, 128, 8
        $region24: #{tpu_custom_call.1} parent=15 // pred_fallthru
          _
        // Predicated region
        $region25: #{tpu_custom_call.1} parent=15 // pred_check
          %p195 = pneg %p90
        $region26: #{tpu_custom_call.1} parent=15 // pred_check_branch
          %197 = sbr.rel (%p195) target = $region28
        $region27: #{tpu_custom_call.1} parent=15 // pred_region
          %s198 = sand.u32 %s18, 1
          %s199 = scalar_lea.sflag [#allocation6], %s198
          %s200 = sand.u32 %s80, 1
          %s201 = smul.addr %s200, 16
          %s202 = scalar_lea.vmem [#allocation7], %s201
          %s203 = smul.u32 2, %s18
          %s204 = ssub.s32 3, %s203
          %p205 = scmp.lt.s32.totalorder %s204, 2
          %s206 = scalar_select %p205, %s204, 2
          %s207 = smul.u32 128, %s206
          %s209 = ssub.s32 256, %s207
          %210 = vsyncadd %s199, %s209
          %p211 = scmp.ne.s32.totalorder 0, %s207
          %s212 = smul.addr %s203, 128
          %s213 = scalar_lea.hbm %s2, %s212
          %s214 = smul.u32 8, %s206
          %s215 = sshll.u32 %s202, 4
          %s216 = int_to_ptr.vmem [resolvable:$true] %s215
          %s217 = sshll.u32 %s214, 4
          %221 = dma.hbm_to_vmem [thread:$0]  (%p211), %s213, %s217, %s216, %s199, 128, 128, 8
        $region28: #{tpu_custom_call.1} parent=15 // pred_fallthru
          _
      $region16: #{tpu_custom_call.1} parent=5 // pred_fallthru
        _
      %p222 = scmp.le.s32.totalorder 1, %s18
      %p223 = scmp.lt.s32.totalorder %s18, 3
      %p224 = pnand %p222, %p223
      %p225 = pneg %p224
      // Predicated region
      $region29: #{tpu_custom_call.1} parent=5 // pred_check
        _
      $region30: #{tpu_custom_call.1} parent=5 // pred_check_branch
        %227 = sbr.rel (%p224) target = $region32
      $region31: #{tpu_custom_call.1} parent=5 // pred_region
        %s228 = ssub.s32 %s18, 1
        %s229 = sand.u32 %s31, 1
        %s230 = scalar_lea.sflag [#allocation3], %s229
        %s231 = sand.u32 %s31, 1
        %s232 = smul.addr %s231, 16
        %s233 = scalar_lea.vmem [#allocation2], %s232
        // Predicated region
        $region33: #{tpu_custom_call.1} parent=31 // pred_check
          %p234 = pneg %p44
        $region34: #{tpu_custom_call.1} parent=31 // pred_check_branch
          %236 = sbr.rel (%p234) target = $region36
        $region35: #{tpu_custom_call.1} parent=31 // pred_region
          %237 = dma.done %s230, 256
        $region36: #{tpu_custom_call.1} parent=31 // pred_fallthru
          _
        %s238 = sand.u32 %s23, 1
        %s239 = scalar_lea.sflag [#allocation6], %s238
        %s240 = sand.u32 %s57, 1
        %s241 = smul.addr %s240, 16
        %s242 = scalar_lea.vmem [#allocation5], %s241
        // Predicated region
        $region37: #{tpu_custom_call.1} parent=31 // pred_check
          %p243 = pneg %p70
        $region38: #{tpu_custom_call.1} parent=31 // pred_check_branch
          %245 = sbr.rel (%p243) target = $region40
        $region39: #{tpu_custom_call.1} parent=31 // pred_region
          %246 = dma.done %s239, 256
        $region40: #{tpu_custom_call.1} parent=31 // pred_fallthru
          _
        %s247 = sand.u32 %s23, 1
        %s248 = scalar_lea.sflag [#allocation6], %s247
        %s249 = sand.u32 %s83, 1
        %s250 = smul.addr %s249, 16
        %s251 = scalar_lea.vmem [#allocation7], %s250
        // Predicated region
        $region41: #{tpu_custom_call.1} parent=31 // pred_check
          %p252 = pneg %p96
        $region42: #{tpu_custom_call.1} parent=31 // pred_check_branch
          %254 = sbr.rel (%p252) target = $region44
        $region43: #{tpu_custom_call.1} parent=31 // pred_region
          %255 = dma.done %s248, 256
        $region44: #{tpu_custom_call.1} parent=31 // pred_fallthru
          _
        %s256 = sand.u32 %s31, 1
        %s257 = scalar_lea.sflag [#allocation3], %s256
        %s258 = sand.u32 %s31, 1
        %s259 = smul.addr %s258, 16
        %s260 = scalar_lea.vmem [#allocation2], %s259
        %p261 = pneg %p44
        %p262 = pneg %p41
        %s263 = sand.u32 %s23, 1
        %s264 = scalar_lea.sflag [#allocation6], %s263
        %s265 = sand.u32 %s57, 1
        %s266 = smul.addr %s265, 16
        %s267 = scalar_lea.vmem [#allocation5], %s266
        %p268 = pneg %p70
        %p269 = pneg %p67
        %s270 = sand.u32 %s23, 1
        %s271 = scalar_lea.sflag [#allocation6], %s270
        %s272 = sand.u32 %s83, 1
        %s273 = smul.addr %s272, 16
        %s274 = scalar_lea.vmem [#allocation7], %s273
        %p275 = pneg %p96
        %p276 = pneg %p93
        %p277 = pneg %p122
        %p278 = pneg %p119
        %s279 = sand.u32 %s109, 1
        %s280 = scalar_lea.sflag [#allocation4], %s279
        %s281 = sand.u32 %s109, 1
        %s282 = smul.addr %s281, 8
        %s283 = scalar_lea.vmem [#allocation8], %s282
        %s284 = smul.u32 2, %s23
        %s285 = ssub.s32 3, %s284
        %p286 = scmp.lt.s32.totalorder %s285, 2
        %s287 = scalar_select %p286, %s285, 2
        %s288 = smul.u32 128, %s287
        %s289 = smul.u32 2, %s23
        %s290 = ssub.s32 3, %s289
        %p291 = scmp.lt.s32.totalorder %s290, 2
        %s292 = scalar_select %p291, %s290, 2
        %s293 = smul.u32 128, %s292
        %s294 = smul.u32 2, %s23
        %s295 = ssub.s32 3, %s294
        %p296 = scmp.lt.s32.totalorder %s295, 2
        %s297 = scalar_select %p296, %s295, 2
        %s298 = smul.u32 128, %s297
        %v299 = vld [vmem:[%s233] sm:$0xff]
        %v300 = vld [vmem:[%s233 + $0x8] sm:$0xff]
        %v301 = vld [vmem:[%s242] sm:$0xff]
        %v302 = vld [vmem:[%s242 + $0x8] sm:$0xff]
        %v303 = vld [vmem:[%s251] sm:$0xff]
        %v304 = vld [vmem:[%s251 + $0x8] sm:$0xff]
        %v305 = vsub.f32 %v299, %v301
        %v306 = vsub.f32 %v300, %v302
        %v307 = vadd.f32 %v305, 1e-06
        %v308 = vadd.f32 %v306, 1e-06
        %v309 = vmul.f32 %v307, %v307
        %v310 = vmul.f32 %v308, %v308
        %vm311 = vcmask 261120
        %v312 = vsel %vm311, %v309, 0.0
        %313 = vadd.xlane.f32.xlu0 %v312
        %v314 = vpop.xlane.xlu0 %313
        %v315 = vsel %vm311, %v310, 0.0
        %316 = vadd.xlane.f32.xlu0 %v315
        %v317 = vpop.xlane.xlu0 %316
        %v318 = vrsqrt.pop %v314
        %v319 = vmul.f32 %v314, %v318
        %vm320 = vcmp.eq.f32.partialorder %v314, inf
        %v321 = vsel %vm320, %v314, %v319
        %vm322 = vcmp.eq.f32.partialorder %v314, 0.0
        %v323 = vand.u32 %v314, 2147483648
        %v324 = vsel %vm322, %v323, %v321
        %v325 = vrsqrt.pop %v317
        %v326 = vmul.f32 %v317, %v325
        %vm327 = vcmp.eq.f32.partialorder %v317, inf
        %v328 = vsel %vm327, %v317, %v326
        %vm329 = vcmp.eq.f32.partialorder %v317, 0.0
        %v330 = vand.u32 %v317, 2147483648
        %v331 = vsel %vm329, %v330, %v328
        %v332 = vsub.f32 %v299, %v303
        %v333 = vsub.f32 %v300, %v304
        %v334 = vadd.f32 %v332, 1e-06
        %v335 = vadd.f32 %v333, 1e-06
        %v336 = vmul.f32 %v334, %v334
        %v337 = vmul.f32 %v335, %v335
        %v338 = vsel %vm311, %v336, 0.0
        %339 = vadd.xlane.f32.xlu0 %v338
        %v340 = vpop.xlane.xlu0 %339
        %v341 = vsel %vm311, %v337, 0.0
        %342 = vadd.xlane.f32.xlu0 %v341
        %v343 = vpop.xlane.xlu0 %342
        %v344 = vrsqrt.pop %v340
        %v345 = vmul.f32 %v340, %v344
        %vm346 = vcmp.eq.f32.partialorder %v340, inf
        %v347 = vsel %vm346, %v340, %v345
        %vm348 = vcmp.eq.f32.partialorder %v340, 0.0
        %v349 = vand.u32 %v340, 2147483648
        %v350 = vsel %vm348, %v349, %v347
        %v351 = vrsqrt.pop %v343
        %v352 = vmul.f32 %v343, %v351
        %vm353 = vcmp.eq.f32.partialorder %v343, inf
        %v354 = vsel %vm353, %v343, %v352
        %vm355 = vcmp.eq.f32.partialorder %v343, 0.0
        %v356 = vand.u32 %v343, 2147483648
        %v357 = vsel %vm355, %v356, %v354
        %v358 = vsub.f32 %v324, %v350
        %v359 = vsub.f32 %v331, %v357
        %v360 = vadd.f32 %v358, 1.0
        %v361 = vadd.f32 %v359, 1.0
        %v362 = vmax.f32 %v360, 0.0
        %v363 = vmax.f32 %v361, 0.0
        %v364 = vlaneseq
        %v365 = vshrl.u32 %v364, 7
        %v366 = vadd.s32 %v365, 8
        %s367 = smul.u32 %s23, 16
        %v368 = vstv %s367
        %v369 = vadd.s32 %v365, %v368
        %v370 = vadd.s32 %v366, %v368
        %vm371 = vcmp.lt.s32.totalorder %v369, 20
        %vm372 = vcmp.lt.s32.totalorder %v370, 20
        %v373 = vsel %vm371, %v362, 0.0
        %v374 = vsel %vm372, %v363, 0.0
        %vm375 = vcmask 7168
        %v376 = vsel %vm375, %v373, 0.0
        %v377 = vsel %vm375, %v374, 0.0
        %v378 = vadd.f32 %v376, %v377
        %379 = vadd.xlane.f32.xlu0 %v378
        %v380 = vpop.xlane.xlu0 %379
        %v381 = vrot.slane %v380, 4
        %v382 = vadd.f32 %v380, %v381
        %v383 = vrot.slane %v382, 2
        %v384 = vadd.f32 %v382, %v383
        %v385 = vrot.slane %v384, 1
        %v386 = vadd.f32 %v384, %v385
        %s387 = vtos %v386
        %v388 = vstv %s387
        %389 = vst [vmem:[%s283] sm:$0xff] %v388
        %s390 = sand.u32 %s109, 1
        %s391 = scalar_lea.sflag [#allocation4], %s390
        %s392 = sand.u32 %s109, 1
        %s393 = smul.addr %s392, 8
        %s394 = scalar_lea.vmem [#allocation8], %s393
        // Predicated region
        $region45: #{tpu_custom_call.1} parent=31 // pred_check
          %p395 = pneg %p119
        $region46: #{tpu_custom_call.1} parent=31 // pred_check_branch
          %397 = sbr.rel (%p395) target = $region48
        $region47: #{tpu_custom_call.1} parent=31 // pred_region
          %s399 = ssub.s32 128, 128
          %400 = vsyncadd %s391, %s399
          %s401 = smul.addr %s23, 128
          %s402 = scalar_lea.hbm %s3, %s401
          %s404 = sshll.u32 %s394, 4
          %s405 = int_to_ptr.vmem [resolvable:$true] %s404
          %407 = dma.vmem_to_hbm [thread:$0]  %s405, 128, %s402, %s391
        $region48: #{tpu_custom_call.1} parent=31 // pred_fallthru
          _
      $region32: #{tpu_custom_call.1} parent=5 // pred_fallthru
        _
      %p408 = scmp.le.s32.totalorder 2, %s18
      // Predicated region
      $region49: #{tpu_custom_call.1} parent=5 // pred_check
        %p409 = pneg %p408
      $region50: #{tpu_custom_call.1} parent=5 // pred_check_branch
        %411 = sbr.rel (%p409) target = $region52
      $region51: #{tpu_custom_call.1} parent=5 // pred_region
        %s412 = ssub.s32 %s18, 2
        // Predicated region
        $region53: #{tpu_custom_call.1} parent=51 // pred_check
          %p413 = pneg %p125
        $region54: #{tpu_custom_call.1} parent=51 // pred_check_branch
          %415 = sbr.rel (%p413) target = $region56
        $region55: #{tpu_custom_call.1} parent=51 // pred_region
          %s416 = sand.u32 %s110, 1
          %s417 = scalar_lea.sflag [#allocation4], %s416
          %s418 = sand.u32 %s110, 1
          %s419 = smul.addr %s418, 8
          %s420 = scalar_lea.vmem [#allocation8], %s419
          %421 = dma.done %s417, 128
        $region56: #{tpu_custom_call.1} parent=51 // pred_fallthru
          _
      $region52: #{tpu_custom_call.1} parent=5 // pred_fallthru
        _
    $region6: #{tpu_custom_call.1} parent=1 // loop_footer
      %s22 = sadd.s32 1, %s18
    $region7: #{tpu_custom_call.1} parent=1 // loop_footer_branch
      %17 = sbr.rel target = $region3
    $region8: #{tpu_custom_call.1} parent=1 // loop_exit
      _
    %422 = vsyncpa [#allocation3], 1
    %s423 = scalar_lea.sflag [#allocation3], 1
    %424 = vsyncpa %s423, 1
    %425 = vsyncpa [#allocation6], 1
    %s426 = scalar_lea.sflag [#allocation6], 1
    %427 = vsyncpa %s426, 1
    %428 = vsyncpa [#allocation4], 1
    %s429 = scalar_lea.sflag [#allocation4], 1
    %430 = vsyncpa %s429, 1

</llo_original>
